<compile_context>
chip_gen: v6e
topology: v6e:2x2x1
jax: 0.10.0
libtpu: 0.0.40
codegen_flags: <defaults>
</compile_context>

<pallas_src>
import functools

import jax
import jax.numpy as jnp
from jax import lax
from jax.experimental import pallas as pl
from jax.experimental.pallas import tpu as pltpu


def _tsallis_kernel(logits_ref, out_ref, acc_s_ref, acc_a_ref, acc_b_ref, *,
                    inv_temperature, alpha, n_rows, n_cols,
                    row_tile, n_tiles, ragged_rows):
    tile = pl.program_id(0)

    @pl.when(tile == 0)
    def _init():
        acc_s_ref[...] = jnp.zeros_like(acc_s_ref)
        acc_a_ref[...] = jnp.zeros_like(acc_a_ref)
        acc_b_ref[...] = jnp.zeros_like(acc_b_ref)

    # Temperature divide folded into a compile-time constant multiply.
    x = logits_ref[...].astype(jnp.float32) * inv_temperature         # (tn, C)

    row_valid = None
    if ragged_rows:
        # Neutralize out-of-bounds rows BEFORE any exp/log so boundary-block
        # garbage (possibly NaN/Inf bit patterns) cannot reach the accumulators.
        row_ids = tile * row_tile + lax.broadcasted_iota(
            jnp.int32, (row_tile, 1), 0)
        row_valid = row_ids < n_rows
        x = jnp.where(row_valid, x, 0.0)

    m = jnp.max(x, axis=1, keepdims=True)                              # (tn, 1)
    xm = x - m
    e = jnp.exp(xm)                                                    # (tn, C)
    row_sum = jnp.sum(e, axis=1, keepdims=True)                        # (tn, 1)
    pred = e * (1.0 / row_sum)             # one reciprocal per row, not per elem

    # Unnormalized entropy weight w_u = 1 + exp(-H); H keeps the +1e-5 eps log
    # exactly like the PyTorch reference.
    h = -jnp.sum(pred * jnp.log(pred + 1e-5), axis=1, keepdims=True)   # (tn, 1)
    w_u = 1.0 + jnp.exp(-h)                                            # (tn, 1)
    if row_valid is not None:
        w_u = jnp.where(row_valid, w_u, 0.0)   # padded rows contribute nothing

    # pred**alpha = exp(alpha * logp), reusing logp = xm - log(row_sum): no extra
    # per-element log on the single EUP slot.
    pred_alpha = jnp.exp(alpha * (xm - jnp.log(row_sum)))              # (tn, C)

    # Single-pass accumulation.  The N/sum(w_u) normalization cancels in the
    # final expression, so only w_u-weighted sums are needed.
    # TODO(synk): if VPU/XLU ever binds here, offload the two row-reductions to
    # the idle MXU via dot_general contracting the row axis.
    acc_s_ref[...] += jnp.sum(w_u, axis=0, keepdims=True)              # (1, 1)
    acc_a_ref[...] += jnp.sum(pred * w_u, axis=0, keepdims=True)       # (1, C)
    acc_b_ref[...] += jnp.sum(pred_alpha * w_u, axis=0, keepdims=True)  # (1, C)

    @pl.when(tile == n_tiles - 1)
    def _finalize():
        a = acc_a_ref[...]                                             # (1, C)
        b = acc_b_ref[...]                                             # (1, C)
        s = acc_s_ref[...]                                             # (1, 1)
        sum_a = jnp.sum(a, axis=1, keepdims=True)                      # (1, 1)
        # sum_n 1/mean(sum_dim)            == C * S / sum_c A_c
        # sum_n sum_c pred^a / sum_dim * w == sum_c B_c / A_c
        term1 = (float(n_cols) * s) / sum_a
        term2 = jnp.sum(b / a, axis=1, keepdims=True)
        out_ref[...] = (term1 - term2) * (1.0 / (alpha - 1.0))


def tsallis_entropy(logits: jax.Array, temperature: float, alpha: float,
                    *, row_tile=None) -> jax.Array:
    """Pallas TPU forward of TsallisEntropy. logits: (N, C). Returns scalar f32."""
    n, c = logits.shape

    # Row-tile selection — no wrapper-side padding at all.  The block's last dim
    # is the full C (legal even when C % 128 != 0); rows are tiled in multiples
    # of 8 sublanes with the ragged last tile masked in-kernel.
    # TODO(synk): for tiny C (<<128, e.g. 10-class MNIST) lane occupancy is
    # C/128; pack k = 128 // C rows per 128-lane register row if that shape ever
    # becomes performance-relevant.
    if row_tile is None:
        block_budget = 2 * 1024 * 1024                 # f32 bytes per input block
        tile = (block_budget // (c * 4)) // 8 * 8
        tile = max(8, min(1024, int(tile)))
    else:
        tile = max(8, (int(row_tile) // 8) * 8)

    if n <= tile:
        tn, n_tiles, ragged = n, 1, False   # fully VMEM-resident, single grid step
    else:
        tn = tile
        n_tiles = int(pl.cdiv(n, tn))
        ragged = (n % tn) != 0

    kernel = functools.partial(
        _tsallis_kernel,
        inv_temperature=1.0 / float(temperature),
        alpha=float(alpha),
        n_rows=int(n),
        n_cols=int(c),
        row_tile=int(tn),
        n_tiles=int(n_tiles),
        ragged_rows=bool(ragged),
    )

    out = pl.pallas_call(
        kernel,
        out_shape=jax.ShapeDtypeStruct((1, 1), jnp.float32),
        grid_spec=pltpu.PrefetchScalarGridSpec(
            num_scalar_prefetch=0,
            grid=(n_tiles,),
            in_specs=[pl.BlockSpec((tn, c), lambda i: (i, 0))],
            out_specs=pl.BlockSpec((1, 1), lambda i: (0, 0)),
            scratch_shapes=[
                pltpu.VMEM((1, 1), jnp.float32),   # S   = sum_n w_u
                pltpu.VMEM((1, c), jnp.float32),   # A_c = sum_n w_u * pred
                pltpu.VMEM((1, c), jnp.float32),   # B_c = sum_n w_u * pred**alpha
            ],
        ),
        # The single grid axis carries the accumulators -> sequential.
        # TODO(synk): on v7x, emit per-tile partial (S, A, B) outputs over a
        # core_parallel row-tile axis with a tiny combine epilogue to use both
        # TensorCores.
        compiler_params=pltpu.CompilerParams(
            dimension_semantics=("arbitrary",),
            vmem_limit_bytes=32 * 1024 * 1024,
        ),
    )(logits)
    return out[0, 0]


def tsallis_entropy_ref(logits, temperature, alpha):
    """Pure-JAX reference mirroring the PyTorch module (for sanity checking)."""
    n, c = logits.shape
    x = logits.astype(jnp.float32) / temperature
    pred = jax.nn.softmax(x, axis=1)
    H = -jnp.sum(pred * jnp.log(pred + 1e-5), axis=1)
    w = 1.0 + jnp.exp(-H)
    w = (n * w / jnp.sum(w))[:, None]
    sum_dim = jnp.sum(pred * w, axis=0, keepdims=True)
    return 1.0 / (alpha - 1.0) * jnp.sum(
        1.0 / jnp.mean(sum_dim) - jnp.sum(pred ** alpha / sum_dim * w, axis=-1)
    )


if __name__ == "__main__":
    temperature, alpha = 2.0, 1.9     # module hyperparameters
    k1, k2, k3 = jax.random.split(jax.random.PRNGKey(0), 3)

    # Case 1: module-sized (batch=8, classes=16) — single VMEM-resident step.
    logits = jax.random.normal(k1, (8, 16), dtype=jnp.float32)
    out = jax.block_until_ready(tsallis_entropy(logits, temperature, alpha))
    ref = tsallis_entropy_ref(logits, temperature, alpha)
    assert jnp.allclose(out, ref, rtol=1e-4, atol=1e-4), (out, ref)

    # Case 2: multi-tile N with a ragged last tile (20 rows, tile 8) and C not a
    # multiple of 128 — exercises the row mask and the unpadded full-C block.
    logits2 = jax.random.normal(k2, (20, 200), dtype=jnp.float32)
    out2 = jax.block_until_ready(
        tsallis_entropy(logits2, temperature, alpha, row_tile=8))
    ref2 = tsallis_entropy_ref(logits2, temperature, alpha)
    assert jnp.allclose(out2, ref2, rtol=1e-4, atol=1e-4), (out2, ref2)

    # Case 3: multi-tile N with exact division (no mask path), lane-aligned C.
    logits3 = jax.random.normal(k3, (64, 256), dtype=jnp.float32)
    out3 = jax.block_until_ready(
        tsallis_entropy(logits3, temperature, alpha, row_tile=16))
    ref3 = tsallis_entropy_ref(logits3, temperature, alpha)
    assert jnp.allclose(out3, ref3, rtol=1e-4, atol=1e-4), (out3, ref3)

    print("KERNEL_OK")
</pallas_src>

<mosaic_0001>
module attributes {stable_mosaic.version = 11 : i64} {
  func.func @_tsallis_kernel(%arg0: i32, %arg1: memref<8x16xf32, #tpu.memory_space<vmem>>, %arg2: memref<1x1xf32, #tpu.memory_space<vmem>>, %arg3: memref<1x1xf32, #tpu.memory_space<vmem>>, %arg4: memref<1x16xf32, #tpu.memory_space<vmem>>, %arg5: memref<1x16xf32, #tpu.memory_space<vmem>>) attributes {dimension_semantics = [#tpu.dimension_semantics<arbitrary>], iteration_bounds = array<i64: 1>, scalar_prefetch = 0 : i64, scratch_operands = 3 : i64, tpu.core_type = #tpu.core_type<tc>, window_params = [{transform_indices = @transform_0, window_bounds = array<i64: 8, 16>}, {pipeline_mode = #tpu.pipeline_mode<synchronous>, transform_indices = @transform_1, window_bounds = array<i64: 1, 1>}]} {
    %c0_i32 = arith.constant 0 : i32
    %0 = arith.cmpi eq, %arg0, %c0_i32 : i32
    %1 = arith.extui %0 : i1 to i32
    %c0_i32_0 = arith.constant 0 : i32
    %2 = arith.cmpi ne, %1, %c0_i32_0 : i32
    scf.if %2 {
      %cst_28 = arith.constant 0.000000e+00 : f32
      %58 = vector.broadcast %cst_28 : f32 to vector<1x1xf32>
      %c0_29 = arith.constant 0 : index
      %c0_30 = arith.constant 0 : index
      %59 = vector.load %arg3[%c0_29, %c0_30] : memref<1x1xf32, #tpu.memory_space<vmem>>, vector<1x1xf32>
      tpu.vector_store %arg3[%c0_29, %c0_30], %58 {strides = array<i32>} : memref<1x1xf32, #tpu.memory_space<vmem>>, vector<1x1xf32>,
      %cst_31 = arith.constant 0.000000e+00 : f32
      %60 = vector.broadcast %cst_31 : f32 to vector<1x16xf32>
      %c0_32 = arith.constant 0 : index
      %c0_33 = arith.constant 0 : index
      %61 = vector.load %arg4[%c0_32, %c0_33] : memref<1x16xf32, #tpu.memory_space<vmem>>, vector<1x16xf32>
      tpu.vector_store %arg4[%c0_32, %c0_33], %60 {strides = array<i32>} : memref<1x16xf32, #tpu.memory_space<vmem>>, vector<1x16xf32>,
      %cst_34 = arith.constant 0.000000e+00 : f32
      %62 = vector.broadcast %cst_34 : f32 to vector<1x16xf32>
      %c0_35 = arith.constant 0 : index
      %c0_36 = arith.constant 0 : index
      %63 = vector.load %arg5[%c0_35, %c0_36] : memref<1x16xf32, #tpu.memory_space<vmem>>, vector<1x16xf32>
      tpu.vector_store %arg5[%c0_35, %c0_36], %62 {strides = array<i32>} : memref<1x16xf32, #tpu.memory_space<vmem>>, vector<1x16xf32>,
    } else {
    }
    %c0 = arith.constant 0 : index
    %c0_1 = arith.constant 0 : index
    %3 = vector.load %arg1[%c0, %c0_1] : memref<8x16xf32, #tpu.memory_space<vmem>>, vector<8x16xf32>
    %cst = arith.constant 5.000000e-01 : f32
    %4 = vector.broadcast %cst : f32 to vector<8x16xf32>
    %5 = arith.mulf %3, %4 : vector<8x16xf32>
    %cst_2 = arith.constant dense<0xFF800000> : vector<8xf32>
    %6 = vector.multi_reduction <maximumf>, %5, %cst_2 [1] : vector<8x16xf32> to vector<8xf32>
    %7 = vector.shape_cast %6 : vector<8xf32> to vector<8x1xf32>
    %8 = vector.broadcast %7 : vector<8x1xf32> to vector<8x16xf32>
    %9 = arith.subf %5, %8 : vector<8x16xf32>
    %10 = math.exp %9 : vector<8x16xf32>
    %cst_3 = arith.constant dense<0.000000e+00> : vector<8xf32>
    %11 = vector.multi_reduction <add>, %10, %cst_3 [1] : vector<8x16xf32> to vector<8xf32>
    %12 = vector.shape_cast %11 : vector<8xf32> to vector<8x1xf32>
    %cst_4 = arith.constant 1.000000e+00 : f32
    %13 = vector.broadcast %cst_4 : f32 to vector<8x1xf32>
    %14 = arith.divf %13, %12 : vector<8x1xf32>
    %15 = vector.broadcast %14 : vector<8x1xf32> to vector<8x16xf32>
    %16 = arith.mulf %10, %15 : vector<8x16xf32>
    %cst_5 = arith.constant 9.99999974E-6 : f32
    %17 = vector.broadcast %cst_5 : f32 to vector<8x16xf32>
    %18 = arith.addf %16, %17 : vector<8x16xf32>
    %19 = math.log %18 : vector<8x16xf32>
    %20 = arith.mulf %16, %19 : vector<8x16xf32>
    %cst_6 = arith.constant dense<0.000000e+00> : vector<8xf32>
    %21 = vector.multi_reduction <add>, %20, %cst_6 [1] : vector<8x16xf32> to vector<8xf32>
    %22 = vector.shape_cast %21 : vector<8xf32> to vector<8x1xf32>
    %cst_7 = arith.constant 0.000000e+00 : f32
    %23 = vector.broadcast %cst_7 : f32 to vector<8x1xf32>
    %24 = arith.subf %23, %22 : vector<8x1xf32>
    %cst_8 = arith.constant 0.000000e+00 : f32
    %25 = vector.broadcast %cst_8 : f32 to vector<8x1xf32>
    %26 = arith.subf %25, %24 : vector<8x1xf32>
    %27 = math.exp %26 : vector<8x1xf32>
    %cst_9 = arith.constant 1.000000e+00 : f32
    %28 = vector.broadcast %cst_9 : f32 to vector<8x1xf32>
    %29 = arith.addf %28, %27 : vector<8x1xf32>
    %30 = math.log %12 : vector<8x1xf32>
    %31 = vector.broadcast %30 : vector<8x1xf32> to vector<8x16xf32>
    %32 = arith.subf %9, %31 : vector<8x16xf32>
    %cst_10 = arith.constant 1.900000e+00 : f32
    %33 = vector.broadcast %cst_10 : f32 to vector<8x16xf32>
    %34 = arith.mulf %33, %32 : vector<8x16xf32>
    %35 = math.exp %34 : vector<8x16xf32>
    %c0_11 = arith.constant 0 : index
    %c0_12 = arith.constant 0 : index
    %36 = vector.load %arg3[%c0_11, %c0_12] : memref<1x1xf32, #tpu.memory_space<vmem>>, vector<1x1xf32>
    %cst_13 = arith.constant dense<0.000000e+00> : vector<1xf32>
    %37 = vector.multi_reduction <add>, %29, %cst_13 [0] : vector<8x1xf32> to vector<1xf32>
    %38 = vector.shape_cast %37 : vector<1xf32> to vector<1x1xf32>
    %39 = arith.addf %36, %38 : vector<1x1xf32>
    %c0_14 = arith.constant 0 : index
    %c0_15 = arith.constant 0 : index
    %40 = vector.load %arg3[%c0_14, %c0_15] : memref<1x1xf32, #tpu.memory_space<vmem>>, vector<1x1xf32>
    tpu.vector_store %arg3[%c0_14, %c0_15], %39 {strides = array<i32>} : memref<1x1xf32, #tpu.memory_space<vmem>>, vector<1x1xf32>,
    %c0_16 = arith.constant 0 : index
    %c0_17 = arith.constant 0 : index
    %41 = vector.load %arg4[%c0_16, %c0_17] : memref<1x16xf32, #tpu.memory_space<vmem>>, vector<1x16xf32>
    %42 = vector.broadcast %29 : vector<8x1xf32> to vector<8x16xf32>
    %43 = arith.mulf %16, %42 : vector<8x16xf32>
    %cst_18 = arith.constant dense<0.000000e+00> : vector<16xf32>
    %44 = vector.multi_reduction <add>, %43, %cst_18 [0] : vector<8x16xf32> to vector<16xf32>
    %45 = vector.shape_cast %44 : vector<16xf32> to vector<1x16xf32>
    %46 = arith.addf %41, %45 : vector<1x16xf32>
    %c0_19 = arith.constant 0 : index
    %c0_20 = arith.constant 0 : index
    %47 = vector.load %arg4[%c0_19, %c0_20] : memref<1x16xf32, #tpu.memory_space<vmem>>, vector<1x16xf32>
    tpu.vector_store %arg4[%c0_19, %c0_20], %46 {strides = array<i32>} : memref<1x16xf32, #tpu.memory_space<vmem>>, vector<1x16xf32>,
    %c0_21 = arith.constant 0 : index
    %c0_22 = arith.constant 0 : index
    %48 = vector.load %arg5[%c0_21, %c0_22] : memref<1x16xf32, #tpu.memory_space<vmem>>, vector<1x16xf32>
    %49 = vector.broadcast %29 : vector<8x1xf32> to vector<8x16xf32>
    %50 = arith.mulf %35, %49 : vector<8x16xf32>
    %cst_23 = arith.constant dense<0.000000e+00> : vector<16xf32>
    %51 = vector.multi_reduction <add>, %50, %cst_23 [0] : vector<8x16xf32> to vector<16xf32>
    %52 = vector.shape_cast %51 : vector<16xf32> to vector<1x16xf32>
    %53 = arith.addf %48, %52 : vector<1x16xf32>
    %c0_24 = arith.constant 0 : index
    %c0_25 = arith.constant 0 : index
    %54 = vector.load %arg5[%c0_24, %c0_25] : memref<1x16xf32, #tpu.memory_space<vmem>>, vector<1x16xf32>
    tpu.vector_store %arg5[%c0_24, %c0_25], %53 {strides = array<i32>} : memref<1x16xf32, #tpu.memory_space<vmem>>, vector<1x16xf32>,
    %c0_i32_26 = arith.constant 0 : i32
    %55 = arith.cmpi eq, %arg0, %c0_i32_26 : i32
    %56 = arith.extui %55 : i1 to i32
    %c0_i32_27 = arith.constant 0 : i32
    %57 = arith.cmpi ne, %56, %c0_i32_27 : i32
    scf.if %57 {
      %c0_28 = arith.constant 0 : index
      %c0_29 = arith.constant 0 : index
      %58 = vector.load %arg4[%c0_28, %c0_29] : memref<1x16xf32, #tpu.memory_space<vmem>>, vector<1x16xf32>
      %c0_30 = arith.constant 0 : index
      %c0_31 = arith.constant 0 : index
      %59 = vector.load %arg5[%c0_30, %c0_31] : memref<1x16xf32, #tpu.memory_space<vmem>>, vector<1x16xf32>
      %c0_32 = arith.constant 0 : index
      %c0_33 = arith.constant 0 : index
      %60 = vector.load %arg3[%c0_32, %c0_33] : memref<1x1xf32, #tpu.memory_space<vmem>>, vector<1x1xf32>
      %cst_34 = arith.constant dense<0.000000e+00> : vector<1xf32>
      %61 = vector.multi_reduction <add>, %58, %cst_34 [1] : vector<1x16xf32> to vector<1xf32>
      %62 = vector.shape_cast %61 : vector<1xf32> to vector<1x1xf32>
      %cst_35 = arith.constant 1.600000e+01 : f32
      %63 = vector.broadcast %cst_35 : f32 to vector<1x1xf32>
      %64 = arith.mulf %63, %60 : vector<1x1xf32>
      %65 = arith.divf %64, %62 : vector<1x1xf32>
      %66 = arith.divf %59, %58 : vector<1x16xf32>
      %cst_36 = arith.constant dense<0.000000e+00> : vector<1xf32>
      %67 = vector.multi_reduction <add>, %66, %cst_36 [1] : vector<1x16xf32> to vector<1xf32>
      %68 = vector.shape_cast %67 : vector<1xf32> to vector<1x1xf32>
      %69 = arith.subf %65, %68 : vector<1x1xf32>
      %cst_37 = arith.constant 1.11111116 : f32
      %70 = vector.broadcast %cst_37 : f32 to vector<1x1xf32>
      %71 = arith.mulf %69, %70 : vector<1x1xf32>
      %c0_38 = arith.constant 0 : index
      %c0_39 = arith.constant 0 : index
      %72 = vector.load %arg2[%c0_38, %c0_39] : memref<1x1xf32, #tpu.memory_space<vmem>>, vector<1x1xf32>
      tpu.vector_store %arg2[%c0_38, %c0_39], %71 {strides = array<i32>} : memref<1x1xf32, #tpu.memory_space<vmem>>, vector<1x1xf32>,
    } else {
    }
    return
  }
  func.func @transform_0(%arg0: i32) -> (i32, i32) {
    %c0_i32 = arith.constant 0 : i32
    %c0_i32_0 = arith.constant 0 : i32
    return %arg0, %c0_i32 : i32, i32
  }
  func.func @transform_1(%arg0: i32) -> (i32, i32) {
    %c0_i32 = arith.constant 0 : i32
    %c0_i32_0 = arith.constant 0 : i32
    %c0_i32_1 = arith.constant 0 : i32
    return %c0_i32, %c0_i32_0 : i32, i32
  }
}

</mosaic_0001>

<llo_original>
// kernel: tpu_custom_call.1
$region0: #{tpu_custom_call.1}
  #allocation0 [shape = 'u32[]', space=smem, size = 0x4, offset = 0x4, fixed_abs, tag = 'smem constant byte address 0x4 - core index']
  #allocation1 [shape = 'u32[144,128]{1,0:T(1,128)}', space=vmem, size = 0x12000, scoped, tag = 'internal scratch']
  #allocation2 [shape = 'f32[1,1]{1,0:T(1,128)}', space=vmem, size = 0x200, scoped, tag = 'scratch operand']
  #allocation3 [shape = 'f32[1,16]{1,0:T(1,128)}', space=vmem, size = 0x200, scoped, tag = 'scratch operand']
  #allocation4 [shape = 'f32[1,16]{1,0:T(1,128)}', space=vmem, size = 0x200, scoped, tag = 'scratch operand']
  %s0 = inlined_call_operand.hbm [shape: f32[8,16], index: 0, kind: input, shape index: {}]
  %s1 = inlined_call_operand.hbm [shape: f32[1,1], index: 1, kind: output, shape index: {}]
  %s2 = sld [smem:[#allocation0]]
  $region26: #{tpu_custom_call.1} parent=0
    _
  %s4 = ssub.s32 1, %s2
  %s5 = scalar_select 0, %s4, %s2
  $region1: #{tpu_custom_call.1} parent=0
    #allocation5 [shape = 'u8[4096]{0}', space=vmem, size = 0x1000, scoped, tag = 'input window, operand 0, single buffered']
    #allocation6 [shape = 's32[1]{0}', space=sflag, size = 0x4, scoped, tag = 'scoped memory for tpu_custom_call.1']
    #allocation7 [shape = 's32[1]{0}', space=sflag, size = 0x4, scoped, tag = 'scoped memory for tpu_custom_call.1']
    #allocation8 [shape = 'u8[512]{0}', space=vmem, size = 0x400, scoped, tag = 'output window, operand 0, single buffered']
    %6 = vsyncpa [#allocation6], 0
    %7 = vsyncpa [#allocation7], 0
    // Predicated region
    $region2: #{tpu_custom_call.1} parent=1 // pred_check
      _
    $region3: #{tpu_custom_call.1} parent=1 // pred_check_branch
      %9 = sbr.rel (0) target = $region5
    $region4: #{tpu_custom_call.1} parent=1 // pred_region
      %s11 = ssub.s32 128, 128
      %12 = vsyncadd [#allocation6], %s11
      %s14 = sshll.u32 [#allocation5], 4
      %s15 = int_to_ptr.vmem [resolvable:$true] %s14
      %17 = dma.hbm_to_vmem [thread:$0]  %s0, 128, %s15, [#allocation6]
    $region5: #{tpu_custom_call.1} parent=1 // pred_fallthru
      _
    // Predicated region
    $region6: #{tpu_custom_call.1} parent=1 // pred_check
      _
    $region7: #{tpu_custom_call.1} parent=1 // pred_check_branch
      %19 = sbr.rel (0) target = $region9
    $region8: #{tpu_custom_call.1} parent=1 // pred_region
      %20 = dma.done [#allocation6], 128
    $region9: #{tpu_custom_call.1} parent=1 // pred_fallthru
      _
    %p21 = scmp.eq.s32.totalorder 0, 0
    // Predicated region
    $region10: #{tpu_custom_call.1} parent=1 // pred_check
      %p22 = pneg %p21
    $region11: #{tpu_custom_call.1} parent=1 // pred_check_branch
      %24 = sbr.rel (%p22) target = $region13
    $region12: #{tpu_custom_call.1} parent=1 // pred_region
      %vm25 = vcmask 0
      %26 = vst.msk [vmem:[#allocation2] sm:$0x1] %vm25, 0.0
      %vm27 = vcmask 122880
      %28 = vst.msk [vmem:[#allocation3] sm:$0x1] %vm27, 0.0
      %29 = vst.msk [vmem:[#allocation4] sm:$0x1] %vm27, 0.0
    $region13: #{tpu_custom_call.1} parent=1 // pred_fallthru
      _
    %v30 = vld [vmem:[#allocation5] sm:$0xff]
    %v31 = vmul.f32 %v30, 0.5
    %vm32 = vcmask 130048
    %v33 = vsel %vm32, %v31, -inf
    %34 = vmax.xlane.f32.xlu0 %v33
    %v35 = vpop.xlane.xlu0 %34
    %v36 = vsub.f32 %v31, %v35
    %v37 = vmul.f32 %v36, 1.442695
    %v38 = vpow.pop %v37
    %v39 = vsel %vm32, %v38, 0.0
    %40 = vadd.xlane.f32.xlu0 %v39
    %v41 = vpop.xlane.xlu0 %40
    %v42 = vrcp.pop %v41
    %v43 = vmul.f32 1.0, %v42
    %v44 = vmul.f32 %v38, %v43
    %v45 = vadd.f32 %v44, 1e-05
    %v46 = vlog2.pop %v45
    %v47 = vmul.f32 %v46, 0.6931472
    %v48 = vmul.f32 %v44, %v47
    %v49 = vsel %vm32, %v48, 0.0
    %50 = vadd.xlane.f32.xlu0 %v49
    %v51 = vpop.xlane.xlu0 %50
    %v52 = vsub.f32 0.0, %v51
    %v53 = vsub.f32 0.0, %v52
    %v54 = vmul.f32 %v53, 1.442695
    %v55 = vpow.pop %v54
    %v56 = vadd.f32 %v55, 1.0
    %v57 = vlog2.pop %v41
    %v58 = vmul.f32 %v57, 0.6931472
    %v59 = vsub.f32 %v36, %v58
    %v60 = vmul.f32 %v59, 1.9
    %v61 = vmul.f32 %v60, 1.442695
    %v62 = vpow.pop %v61
    %v63 = vld [vmem:[#allocation2] sm:$0x1]
    %v64 = vrot.slane %v56, 4
    %v65 = vadd.f32 %v56, %v64
    %v66 = vrot.slane %v65, 2
    %v67 = vadd.f32 %v65, %v66
    %v68 = vrot.slane %v67, 1
    %v69 = vadd.f32 %v67, %v68
    %v70 = vadd.f32 %v63, %v69
    %vm71 = vcmask 0
    %72 = vst.msk [vmem:[#allocation2] sm:$0x1] %vm71, %v70
    %v73 = vld [vmem:[#allocation3] sm:$0x1]
    %v74 = vmul.f32 %v44, %v56
    %v75 = vsel %vm32, %v74, 0.0
    %v76 = vrot.slane %v75, 4
    %v77 = vadd.f32 %v75, %v76
    %v78 = vrot.slane %v77, 2
    %v79 = vadd.f32 %v77, %v78
    %v80 = vrot.slane %v79, 1
    %v81 = vadd.f32 %v79, %v80
    %v82 = vadd.f32 %v73, %v81
    %vm83 = vcmask 122880
    %84 = vst.msk [vmem:[#allocation3] sm:$0x1] %vm83, %v82
    %v85 = vld [vmem:[#allocation4] sm:$0x1]
    %v86 = vmul.f32 %v62, %v56
    %v87 = vsel %vm32, %v86, 0.0
    %v88 = vrot.slane %v87, 4
    %v89 = vadd.f32 %v87, %v88
    %v90 = vrot.slane %v89, 2
    %v91 = vadd.f32 %v89, %v90
    %v92 = vrot.slane %v91, 1
    %v93 = vadd.f32 %v91, %v92
    %v94 = vadd.f32 %v85, %v93
    %95 = vst.msk [vmem:[#allocation4] sm:$0x1] %vm83, %v94
    // Predicated region
    $region14: #{tpu_custom_call.1} parent=1 // pred_check
      %p96 = pneg %p21
    $region15: #{tpu_custom_call.1} parent=1 // pred_check_branch
      %98 = sbr.rel (%p96) target = $region17
    $region16: #{tpu_custom_call.1} parent=1 // pred_region
      %v99 = vld [vmem:[#allocation3] sm:$0x1]
      %v100 = vld [vmem:[#allocation4] sm:$0x1]
      %v101 = vld [vmem:[#allocation2] sm:$0x1]
      %v102 = vsel %vm83, %v99, 0.0
      %103 = vadd.xlane.f32.xlu0 %v102
      %v104 = vpop.xlane.xlu0 %103
      %v105 = vmul.f32 %v101, 16.0
      %v106 = vrcp.pop %v104
      %v107 = vmul.f32 %v105, %v106
      %v108 = vrcp.pop %v99
      %v109 = vmul.f32 %v100, %v108
      %v110 = vsel %vm83, %v109, 0.0
      %111 = vadd.xlane.f32.xlu0 %v110
      %v112 = vpop.xlane.xlu0 %111
      %v113 = vsub.f32 %v107, %v112
      %v114 = vmul.f32 %v113, 1.1111112
      %115 = vst.msk [vmem:[#allocation8] sm:$0x1] %vm71, %v114
    $region17: #{tpu_custom_call.1} parent=1 // pred_fallthru
      _
    // Predicated region
    $region18: #{tpu_custom_call.1} parent=1 // pred_check
      _
    $region19: #{tpu_custom_call.1} parent=1 // pred_check_branch
      %117 = sbr.rel (0) target = $region21
    $region20: #{tpu_custom_call.1} parent=1 // pred_region
      %s119 = ssub.s32 16, 16
      %120 = vsyncadd [#allocation7], %s119
      %s122 = sshll.u32 [#allocation8], 4
      %s123 = int_to_ptr.vmem [resolvable:$true] %s122
      %125 = dma.vmem_to_hbm [thread:$0]  %s123, 16, %s1, [#allocation7]
    $region21: #{tpu_custom_call.1} parent=1 // pred_fallthru
      _
    // Predicated region
    $region22: #{tpu_custom_call.1} parent=1 // pred_check
      _
    $region23: #{tpu_custom_call.1} parent=1 // pred_check_branch
      %127 = sbr.rel (0) target = $region25
    $region24: #{tpu_custom_call.1} parent=1 // pred_region
      %128 = dma.done [#allocation7], 16
    $region25: #{tpu_custom_call.1} parent=1 // pred_fallthru
      _
    %129 = vsyncpa [#allocation6], 1
    %130 = vsyncpa [#allocation7], 1

</llo_original>
